<compile_context>
chip_gen: v7x
topology: tpu7x:2x2x1
jax: 0.10.0
libtpu: 0.0.40
codegen_flags: <defaults>
</compile_context>

<pallas_src>
import jax
import jax.numpy as jnp
from jax.experimental import pallas as pl
from jax.experimental.pallas import tpu as pltpu


def cnn4_kernel(x_ref, wc_ref, bc_ref, w1_ref, b1_ref, w2_ref, b2_ref, out_ref):
    # x_ref:  (L_FIRST, TB)     bf16, batch on the lane axis
    # wc_ref: (L_SECOND, L_FIRST)  bf16  1x1-conv weight (out, in)
    # w1_ref: (L_SECOND, L_SECOND) bf16  first linear weight (out, in)
    # w2_ref: (CLASSES, L_SECOND)  bf16  second linear weight (out, in)
    # biases: (out, 1) f32
    # out_ref:(CLASSES, TB) f32, lane-dense log-probs (class axis = sublanes)
    x = x_ref[...]

    # linear_1: Conv2d(kernel=1) on a 1x1 map == matmul, then ReLU.
    # TODO(synk): Dropout is identity here (inference mode); no RNG mask.
    h1 = jnp.dot(wc_ref[...], x, preferred_element_type=jnp.float32) + bc_ref[...]
    h1 = jnp.maximum(h1, 0.0)

    # linear_2[0..1]: Linear + ReLU (bf16 MXU operands, f32 accumulate/epilogue)
    h2 = jnp.dot(w1_ref[...], h1.astype(w1_ref.dtype),
                 preferred_element_type=jnp.float32) + b1_ref[...]
    h2 = jnp.maximum(h2, 0.0)

    # linear_2[3]: Linear -> logits (CLASSES, TB)
    logits = jnp.dot(w2_ref[...], h2.astype(w2_ref.dtype),
                     preferred_element_type=jnp.float32) + b2_ref[...]

    # linear_2[4]: LogSoftmax over the class axis (axis 0 in this layout), f32.
    m = jnp.max(logits, axis=0, keepdims=True)
    lse = m + jnp.log(jnp.sum(jnp.exp(logits - m), axis=0, keepdims=True))
    out_ref[...] = logits - lse


def cnn4_forward(x_nchw, params, *, batch_tile=1024):
    """x_nchw: (B, L_FIRST, 1, 1). Returns (log_probs (B, CLASSES), x_nchw)."""
    B, C, H, W = x_nchw.shape
    assert H == 1 and W == 1, "CNN4 forward only type-checks with 1x1 spatial input"

    # Lane-dense layout: batch on the last axis; bf16 for the streamed operands.
    x_t = x_nchw.reshape(B, C).T.astype(jnp.bfloat16)              # (L_FIRST, B)

    # Pad batch up to a multiple of 128 lanes, then to a multiple of the tile.
    b_pad = ((B + 127) // 128) * 128
    tb = min(batch_tile, b_pad)
    b_pad = ((b_pad + tb - 1) // tb) * tb
    if b_pad != B:
        x_t = jnp.pad(x_t, ((0, 0), (0, b_pad - B)))

    # Weights stay (out, in); biases become (out, 1) columns. All tiny (<10 KiB).
    wc = params["conv_w"].reshape(params["conv_w"].shape[0], C).astype(jnp.bfloat16)
    bc = params["conv_b"].reshape(-1, 1).astype(jnp.float32)
    w1 = params["fc1_w"].astype(jnp.bfloat16)
    b1 = params["fc1_b"].reshape(-1, 1).astype(jnp.float32)
    w2 = params["fc2_w"].astype(jnp.bfloat16)
    b2 = params["fc2_b"].reshape(-1, 1).astype(jnp.float32)
    n_classes = w2.shape[0]

    # Weights/biases: full-array blocks with constant index_map -> resident in
    # VMEM across all grid steps (loaded once).
    resident = lambda a: pl.BlockSpec(a.shape, lambda i: (0, 0))

    log_probs_t = pl.pallas_call(
        cnn4_kernel,
        out_shape=jax.ShapeDtypeStruct((n_classes, b_pad), jnp.float32),
        grid=(b_pad // tb,),
        in_specs=[
            pl.BlockSpec((C, tb), lambda i: (0, i)),   # x: tiled over batch
            resident(wc), resident(bc),
            resident(w1), resident(b1),
            resident(w2), resident(b2),
        ],
        out_specs=pl.BlockSpec((n_classes, tb), lambda i: (0, i)),
        compiler_params=pltpu.CompilerParams(
            dimension_semantics=("parallel",)),
    )(x_t, wc, bc, w1, b1, w2, b2)

    # Wrapper-side layout plumbing back to the PyTorch-style (B, CLASSES) view.
    log_probs = log_probs_t[:, :B].T
    return log_probs, x_nchw


def init_params(key, l_first, l_second, classes):
    ks = jax.random.split(key, 6)
    scale = 0.1
    return {
        # Conv2d(L_FIRST, L_SECOND, kernel=1): weight (L_SECOND, L_FIRST, 1, 1)
        "conv_w": scale * jax.random.normal(ks[0], (l_second, l_first, 1, 1), jnp.float32),
        "conv_b": scale * jax.random.normal(ks[1], (l_second,), jnp.float32),
        # Linear(L_SECOND, L_SECOND): weight (out, in)
        "fc1_w": scale * jax.random.normal(ks[2], (l_second, l_second), jnp.float32),
        "fc1_b": scale * jax.random.normal(ks[3], (l_second,), jnp.float32),
        # Linear(L_SECOND, CLASSES)
        "fc2_w": scale * jax.random.normal(ks[4], (classes, l_second), jnp.float32),
        "fc2_b": scale * jax.random.normal(ks[5], (classes,), jnp.float32),
    }


def _reference_forward(x_nchw, params):
    """Pure-JAX f32 reference of the PyTorch module (eval mode)."""
    B, C, _, _ = x_nchw.shape
    x = x_nchw.reshape(B, C).astype(jnp.float32)
    wc = params["conv_w"].reshape(params["conv_w"].shape[0], C)
    h1 = jnp.maximum(x @ wc.T + params["conv_b"], 0.0)
    h2 = jnp.maximum(h1 @ params["fc1_w"].T + params["fc1_b"], 0.0)
    logits = h2 @ params["fc2_w"].T + params["fc2_b"]
    return jax.nn.log_softmax(logits, axis=1)


if __name__ == "__main__":
    L_FIRST, SCI_L_SECOND, CLASSES = 4, 32, 10
    B = 8

    key = jax.random.PRNGKey(0)
    k_x, k_p = jax.random.split(key)
    x = jax.random.normal(k_x, (B, L_FIRST, 1, 1), jnp.float32)   # NCHW, H=W=1
    params = init_params(k_p, L_FIRST, SCI_L_SECOND, CLASSES)

    log_probs, x_out = cnn4_forward(x, params)
    jax.block_until_ready((log_probs, x_out))

    # Sanity: shapes, log-softmax rows (log-)sum to ~0, passthrough, and
    # agreement with an f32 reference (loose tol: kernel streams bf16 operands).
    ref = _reference_forward(x, params)
    row_sums = jnp.sum(jnp.exp(log_probs), axis=1)
    assert log_probs.shape == (B, CLASSES)
    assert jnp.allclose(row_sums, 1.0, atol=1e-5)
    assert jnp.array_equal(x_out, x)
    assert jnp.allclose(log_probs, ref, atol=5e-2)

    print("KERNEL_OK")
</pallas_src>

<mosaic_0001>
module attributes {stable_mosaic.version = 11 : i64} {
  func.func @cnn4_kernel(%arg0: i32, %arg1: memref<4x128xbf16, #tpu.memory_space<vmem>>, %arg2: memref<32x4xbf16, #tpu.memory_space<vmem>>, %arg3: memref<32x1xf32, #tpu.memory_space<vmem>>, %arg4: memref<32x32xbf16, #tpu.memory_space<vmem>>, %arg5: memref<32x1xf32, #tpu.memory_space<vmem>>, %arg6: memref<10x32xbf16, #tpu.memory_space<vmem>>, %arg7: memref<10x1xf32, #tpu.memory_space<vmem>>, %arg8: memref<10x128xf32, #tpu.memory_space<vmem>>) attributes {dimension_semantics = [#tpu.dimension_semantics<parallel>], iteration_bounds = array<i64: 1>, scalar_prefetch = 0 : i64, scratch_operands = 0 : i64, tpu.core_type = #tpu.core_type<tc>, window_params = [{transform_indices = @transform_0, window_bounds = array<i64: 4, 128>}, {pipeline_mode = #tpu.pipeline_mode<synchronous>, transform_indices = @transform_1, window_bounds = array<i64: 32, 4>}, {pipeline_mode = #tpu.pipeline_mode<synchronous>, transform_indices = @transform_2, window_bounds = array<i64: 32, 1>}, {pipeline_mode = #tpu.pipeline_mode<synchronous>, transform_indices = @transform_3, window_bounds = array<i64: 32, 32>}, {pipeline_mode = #tpu.pipeline_mode<synchronous>, transform_indices = @transform_4, window_bounds = array<i64: 32, 1>}, {pipeline_mode = #tpu.pipeline_mode<synchronous>, transform_indices = @transform_5, window_bounds = array<i64: 10, 32>}, {pipeline_mode = #tpu.pipeline_mode<synchronous>, transform_indices = @transform_6, window_bounds = array<i64: 10, 1>}, {transform_indices = @transform_7, window_bounds = array<i64: 10, 128>}]} {
    %c0 = arith.constant 0 : index
    %c0_0 = arith.constant 0 : index
    %0 = vector.load %arg1[%c0, %c0_0] : memref<4x128xbf16, #tpu.memory_space<vmem>>, vector<4x128xbf16>
    %c0_1 = arith.constant 0 : index
    %c0_2 = arith.constant 0 : index
    %1 = vector.load %arg2[%c0_1, %c0_2] : memref<32x4xbf16, #tpu.memory_space<vmem>>, vector<32x4xbf16>
    %cst = arith.constant dense<0.000000e+00> : vector<32x128xf32>
    %2 = tpu.matmul %1, %0, %cst {dimension_numbers = #tpu.dot_dimension_numbers<[1], [0], [0], [1], [0, 0, 1, 1], [], []>} : vector<32x4xbf16>, vector<4x128xbf16>, vector<32x128xf32> -> vector<32x128xf32>
    %c0_3 = arith.constant 0 : index
    %c0_4 = arith.constant 0 : index
    %3 = vector.load %arg3[%c0_3, %c0_4] : memref<32x1xf32, #tpu.memory_space<vmem>>, vector<32x1xf32>
    %4 = vector.broadcast %3 : vector<32x1xf32> to vector<32x128xf32>
    %5 = arith.addf %2, %4 : vector<32x128xf32>
    %cst_5 = arith.constant 0.000000e+00 : f32
    %6 = vector.broadcast %cst_5 : f32 to vector<32x128xf32>
    %7 = arith.maximumf %5, %6 : vector<32x128xf32>
    %c0_6 = arith.constant 0 : index
    %c0_7 = arith.constant 0 : index
    %8 = vector.load %arg4[%c0_6, %c0_7] : memref<32x32xbf16, #tpu.memory_space<vmem>>, vector<32x32xbf16>
    %9 = arith.truncf %7 : vector<32x128xf32> to vector<32x128xbf16>
    %cst_8 = arith.constant dense<0.000000e+00> : vector<32x128xf32>
    %10 = tpu.matmul %8, %9, %cst_8 {dimension_numbers = #tpu.dot_dimension_numbers<[1], [0], [0], [1], [0, 0, 1, 1], [], []>} : vector<32x32xbf16>, vector<32x128xbf16>, vector<32x128xf32> -> vector<32x128xf32>
    %c0_9 = arith.constant 0 : index
    %c0_10 = arith.constant 0 : index
    %11 = vector.load %arg5[%c0_9, %c0_10] : memref<32x1xf32, #tpu.memory_space<vmem>>, vector<32x1xf32>
    %12 = vector.broadcast %11 : vector<32x1xf32> to vector<32x128xf32>
    %13 = arith.addf %10, %12 : vector<32x128xf32>
    %cst_11 = arith.constant 0.000000e+00 : f32
    %14 = vector.broadcast %cst_11 : f32 to vector<32x128xf32>
    %15 = arith.maximumf %13, %14 : vector<32x128xf32>
    %c0_12 = arith.constant 0 : index
    %c0_13 = arith.constant 0 : index
    %16 = vector.load %arg6[%c0_12, %c0_13] : memref<10x32xbf16, #tpu.memory_space<vmem>>, vector<10x32xbf16>
    %17 = arith.truncf %15 : vector<32x128xf32> to vector<32x128xbf16>
    %cst_14 = arith.constant dense<0.000000e+00> : vector<10x128xf32>
    %18 = tpu.matmul %16, %17, %cst_14 {dimension_numbers = #tpu.dot_dimension_numbers<[1], [0], [0], [1], [0, 0, 1, 1], [], []>} : vector<10x32xbf16>, vector<32x128xbf16>, vector<10x128xf32> -> vector<10x128xf32>
    %c0_15 = arith.constant 0 : index
    %c0_16 = arith.constant 0 : index
    %19 = vector.load %arg7[%c0_15, %c0_16] : memref<10x1xf32, #tpu.memory_space<vmem>>, vector<10x1xf32>
    %20 = vector.broadcast %19 : vector<10x1xf32> to vector<10x128xf32>
    %21 = arith.addf %18, %20 : vector<10x128xf32>
    %cst_17 = arith.constant dense<0xFF800000> : vector<128xf32>
    %22 = vector.multi_reduction <maximumf>, %21, %cst_17 [0] : vector<10x128xf32> to vector<128xf32>
    %23 = vector.shape_cast %22 : vector<128xf32> to vector<1x128xf32>
    %24 = vector.broadcast %23 : vector<1x128xf32> to vector<10x128xf32>
    %25 = arith.subf %21, %24 : vector<10x128xf32>
    %26 = math.exp %25 : vector<10x128xf32>
    %cst_18 = arith.constant dense<0.000000e+00> : vector<128xf32>
    %27 = vector.multi_reduction <add>, %26, %cst_18 [0] : vector<10x128xf32> to vector<128xf32>
    %28 = vector.shape_cast %27 : vector<128xf32> to vector<1x128xf32>
    %29 = math.log %28 : vector<1x128xf32>
    %30 = arith.addf %23, %29 : vector<1x128xf32>
    %31 = vector.broadcast %30 : vector<1x128xf32> to vector<10x128xf32>
    %32 = arith.subf %21, %31 : vector<10x128xf32>
    %c0_19 = arith.constant 0 : index
    %c0_20 = arith.constant 0 : index
    %33 = vector.load %arg8[%c0_19, %c0_20] : memref<10x128xf32, #tpu.memory_space<vmem>>, vector<10x128xf32>
    tpu.vector_store %arg8[%c0_19, %c0_20], %32 {strides = array<i32>} : memref<10x128xf32, #tpu.memory_space<vmem>>, vector<10x128xf32>,
    return
  }
  func.func @transform_0(%arg0: i32) -> (i32, i32) {
    %c0_i32 = arith.constant 0 : i32
    %c0_i32_0 = arith.constant 0 : i32
    return %c0_i32, %arg0 : i32, i32
  }
  func.func @transform_1(%arg0: i32) -> (i32, i32) {
    %c0_i32 = arith.constant 0 : i32
    %c0_i32_0 = arith.constant 0 : i32
    %c0_i32_1 = arith.constant 0 : i32
    return %c0_i32, %c0_i32_0 : i32, i32
  }
  func.func @transform_2(%arg0: i32) -> (i32, i32) {
    %c0_i32 = arith.constant 0 : i32
    %c0_i32_0 = arith.constant 0 : i32
    %c0_i32_1 = arith.constant 0 : i32
    return %c0_i32, %c0_i32_0 : i32, i32
  }
  func.func @transform_3(%arg0: i32) -> (i32, i32) {
    %c0_i32 = arith.constant 0 : i32
    %c0_i32_0 = arith.constant 0 : i32
    %c0_i32_1 = arith.constant 0 : i32
    return %c0_i32, %c0_i32_0 : i32, i32
  }
  func.func @transform_4(%arg0: i32) -> (i32, i32) {
    %c0_i32 = arith.constant 0 : i32
    %c0_i32_0 = arith.constant 0 : i32
    %c0_i32_1 = arith.constant 0 : i32
    return %c0_i32, %c0_i32_0 : i32, i32
  }
  func.func @transform_5(%arg0: i32) -> (i32, i32) {
    %c0_i32 = arith.constant 0 : i32
    %c0_i32_0 = arith.constant 0 : i32
    %c0_i32_1 = arith.constant 0 : i32
    return %c0_i32, %c0_i32_0 : i32, i32
  }
  func.func @transform_6(%arg0: i32) -> (i32, i32) {
    %c0_i32 = arith.constant 0 : i32
    %c0_i32_0 = arith.constant 0 : i32
    %c0_i32_1 = arith.constant 0 : i32
    return %c0_i32, %c0_i32_0 : i32, i32
  }
  func.func @transform_7(%arg0: i32) -> (i32, i32) {
    %c0_i32 = arith.constant 0 : i32
    %c0_i32_0 = arith.constant 0 : i32
    return %c0_i32, %arg0 : i32, i32
  }
}

</mosaic_0001>

<llo_original>
// kernel: tpu_custom_call.1
$region0: #{tpu_custom_call.1}
  #allocation0 [shape = 'u32[]', space=smem, size = 0x4, offset = 0x4, fixed_abs, tag = 'smem constant byte address 0x4 - core index']
  #allocation1 [shape = 'u32[144,128]{1,0:T(1,128)}', space=vmem, size = 0x12000, scoped, tag = 'internal scratch']
  %s0 = inlined_call_operand.vmem [shape: bf16[4,128], index: 0, kind: input, shape index: {}]
  %s1 = inlined_call_operand.vmem [shape: bf16[32,4], index: 1, kind: input, shape index: {}]
  %s2 = inlined_call_operand.vmem [shape: f32[32,1], index: 2, kind: input, shape index: {}]
  %s3 = inlined_call_operand.vmem [shape: bf16[32,32], index: 3, kind: input, shape index: {}]
  %s4 = inlined_call_operand.vmem [shape: f32[32,1], index: 4, kind: input, shape index: {}]
  %s5 = inlined_call_operand.vmem [shape: bf16[10,32], index: 5, kind: input, shape index: {}]
  %s6 = inlined_call_operand.vmem [shape: f32[10,1], index: 6, kind: input, shape index: {}]
  %s7 = inlined_call_operand.hbm [shape: f32[10,128], index: 7, kind: output, shape index: {}]
  %s8 = sld [smem:[#allocation0]]
  $region38: #{tpu_custom_call.1} parent=0
    _
  %s10 = ssub.s32 1, %s8
  %s11 = scalar_select 0, %s10, %s8
  $region1: #{tpu_custom_call.1} parent=0
    #allocation2 [shape = 'u8[8192]{0}', space=vmem, size = 0x2000, scoped, tag = 'output window, operand 0, single buffered']
    #allocation3 [shape = 's32[1]{0}', space=sflag, size = 0x4, scoped, tag = 'scoped memory for tpu_custom_call.1']
    %12 = vsyncpa [#allocation3], 0
    // Predicated region
    $region2: #{tpu_custom_call.1} parent=1 // pred_check
      _
    $region3: #{tpu_custom_call.1} parent=1 // pred_check_branch
      %14 = sbr.rel (0) target = $region5
    $region4: #{tpu_custom_call.1} parent=1 // pred_region
      _
    $region5: #{tpu_custom_call.1} parent=1 // pred_fallthru
      _
    // Predicated region
    $region6: #{tpu_custom_call.1} parent=1 // pred_check
      _
    $region7: #{tpu_custom_call.1} parent=1 // pred_check_branch
      %16 = sbr.rel (0) target = $region9
    $region8: #{tpu_custom_call.1} parent=1 // pred_region
      _
    $region9: #{tpu_custom_call.1} parent=1 // pred_fallthru
      _
    // Predicated region
    $region10: #{tpu_custom_call.1} parent=1 // pred_check
      _
    $region11: #{tpu_custom_call.1} parent=1 // pred_check_branch
      %18 = sbr.rel (0) target = $region13
    $region12: #{tpu_custom_call.1} parent=1 // pred_region
      _
    $region13: #{tpu_custom_call.1} parent=1 // pred_fallthru
      _
    // Predicated region
    $region14: #{tpu_custom_call.1} parent=1 // pred_check
      _
    $region15: #{tpu_custom_call.1} parent=1 // pred_check_branch
      %20 = sbr.rel (0) target = $region17
    $region16: #{tpu_custom_call.1} parent=1 // pred_region
      _
    $region17: #{tpu_custom_call.1} parent=1 // pred_fallthru
      _
    // Predicated region
    $region18: #{tpu_custom_call.1} parent=1 // pred_check
      _
    $region19: #{tpu_custom_call.1} parent=1 // pred_check_branch
      %22 = sbr.rel (0) target = $region21
    $region20: #{tpu_custom_call.1} parent=1 // pred_region
      _
    $region21: #{tpu_custom_call.1} parent=1 // pred_fallthru
      _
    // Predicated region
    $region22: #{tpu_custom_call.1} parent=1 // pred_check
      _
    $region23: #{tpu_custom_call.1} parent=1 // pred_check_branch
      %24 = sbr.rel (0) target = $region25
    $region24: #{tpu_custom_call.1} parent=1 // pred_region
      _
    $region25: #{tpu_custom_call.1} parent=1 // pred_fallthru
      _
    // Predicated region
    $region26: #{tpu_custom_call.1} parent=1 // pred_check
      _
    $region27: #{tpu_custom_call.1} parent=1 // pred_check_branch
      %26 = sbr.rel (0) target = $region29
    $region28: #{tpu_custom_call.1} parent=1 // pred_region
      _
    $region29: #{tpu_custom_call.1} parent=1 // pred_fallthru
      _
    %v28 = vld [vmem:[%s0] sm:$0x3]
    %v29 = vld [vmem:[%s1] sm:$0xf]
    %v30 = vld [vmem:[%s1 + $0x4] sm:$0xf]
    %v31 = vld [vmem:[%s1 + $0x8] sm:$0xf]
    %v32 = vld [vmem:[%s1 + $0xc] sm:$0xf]
    %v33 = vld [vmem:[%s2] sm:$0xff]
    %v34 = vld [vmem:[%s2 + $0x8] sm:$0xff]
    %v35 = vld [vmem:[%s2 + $0x10] sm:$0xff]
    %v36 = vld [vmem:[%s2 + $0x18] sm:$0xff]
    %38 = vset.pattern.permute.xlu0 0
    %39 = vperm.xlu0 %38, %v33
    %v40 = vpop.permute.xlu0 %39
    %43 = vset.pattern.permute.xlu0 0
    %44 = vperm.xlu0 %43, %v34
    %v45 = vpop.permute.xlu0 %44
    %48 = vset.pattern.permute.xlu0 0
    %49 = vperm.xlu0 %48, %v35
    %v50 = vpop.permute.xlu0 %49
    %53 = vset.pattern.permute.xlu0 0
    %54 = vperm.xlu0 %53, %v36
    %v55 = vpop.permute.xlu0 %54
    %v61 = vunpack.c.l.b16 %v29
    %v62 = vunpack.c.l.b16 %v30
    %v63 = vunpack.c.l.b16 %v31
    %v64 = vunpack.c.l.b16 %v32
    %v65 = vpack.c.b16 %v62, %v61
    %v66 = vpack.c.b16 %v64, %v63
    %vm67 = vcmask 31744
    %v69 = vsel %vm67, %v65, 0
    %v72 = vsel %vm67, %v66, 0
    %vm74 = vcmask 1041408
    %v76 = vsel %vm74, %v28, 0
    %78 = vmatprep.subr.bf16.mxu0 0
    %79 = vmatpush1.bf16.msra.mxu0 %v76
    %80 = vmatprep.subr.bf16.mxu0 0
    %81 = vmatpush1.bf16.msra.mxu0 0
    %82 = vmatprep.subr.bf16.mxu0 0
    %83 = vmatpush1.bf16.msra.mxu0 0
    %84 = vmatprep.subr.bf16.mxu0 0
    %85 = vmatpush1.bf16.msra.mxu0 0
    %86 = vmatprep.subr.bf16.mxu0 0
    %87 = vmatpush1.bf16.msra.mxu0 0
    %88 = vmatprep.subr.bf16.mxu0 0
    %89 = vmatpush1.bf16.msra.mxu0 0
    %90 = vmatprep.subr.bf16.mxu0 0
    %91 = vmatpush1.bf16.msra.mxu0 0
    %92 = vmatprep.subr.bf16.mxu0 0
    %93 = vmatpush1.bf16.msra.mxu0 0
    %94 = vmatprep.subr.bf16.mxu0 0
    %95 = vmatpush1.bf16.msra.mxu0 0
    %96 = vmatprep.subr.bf16.mxu0 0
    %97 = vmatpush1.bf16.msra.mxu0 0
    %98 = vmatprep.subr.bf16.mxu0 0
    %99 = vmatpush1.bf16.msra.mxu0 0
    %100 = vmatprep.subr.bf16.mxu0 0
    %101 = vmatpush1.bf16.msra.mxu0 0
    %102 = vmatprep.subr.bf16.mxu0 0
    %103 = vmatpush1.bf16.msra.mxu0 0
    %104 = vmatprep.subr.bf16.mxu0 0
    %105 = vmatpush1.bf16.msra.mxu0 0
    %106 = vmatprep.subr.bf16.mxu0 0
    %107 = vmatpush1.bf16.msra.mxu0 0
    %108 = vmatprep.subr.bf16.mxu0 0
    %109 = vmatpush1.bf16.msra.mxu0 0
    %110 = vmatprep.mubr.bf16.mxu0 0
    %111 = vmatmul.mubr.bf16.gmra.mrb[0].mxu0 %v69
    %v112 = vpop.f32.mrb[0].mxu0
    %v113 = vadd.f32 %v40, %v112
    %v114 = vpop.f32.mrb[0].mxu0
    %v115 = vpop.f32.mrb[0].mxu0
    %v116 = vadd.f32 %v45, %v115
    %v117 = vpop.f32.mrb[0].mxu0
    %118 = vmatprep.mubr.bf16.mxu0 0
    %119 = vmatmul.mubr.bf16.gmra.mrb[0].mxu0 %v72
    %v120 = vpop.f32.mrb[0].mxu0
    %v121 = vadd.f32 %v50, %v120
    %v122 = vpop.f32.mrb[0].mxu0
    %v123 = vpop.f32.mrb[0].mxu0
    %v124 = vadd.f32 %v55, %v123
    %v125 = vpop.f32.mrb[0].mxu0
    %126 = vdwg.mxu0
    %v127 = vmax.f32 %v113, 0.0
    %v128 = vmax.f32 %v116, 0.0
    %v129 = vmax.f32 %v121, 0.0
    %v130 = vmax.f32 %v124, 0.0
    %v131 = vld [vmem:[%s3] sm:$0xf]
    %v132 = vld [vmem:[%s3 + $0x4] sm:$0xf]
    %v133 = vld [vmem:[%s3 + $0x8] sm:$0xf]
    %v134 = vld [vmem:[%s3 + $0xc] sm:$0xf]
    %v135 = vpack.c.bf16 %v128, %v127
    %v136 = vpack.c.bf16 %v130, %v129
    %v137 = vld [vmem:[%s4] sm:$0xff]
    %v138 = vld [vmem:[%s4 + $0x8] sm:$0xff]
    %v139 = vld [vmem:[%s4 + $0x10] sm:$0xff]
    %v140 = vld [vmem:[%s4 + $0x18] sm:$0xff]
    %142 = vset.pattern.permute.xlu0 0
    %143 = vperm.xlu0 %142, %v137
    %v144 = vpop.permute.xlu0 %143
    %147 = vset.pattern.permute.xlu0 0
    %148 = vperm.xlu0 %147, %v138
    %v149 = vpop.permute.xlu0 %148
    %152 = vset.pattern.permute.xlu0 0
    %153 = vperm.xlu0 %152, %v139
    %v154 = vpop.permute.xlu0 %153
    %157 = vset.pattern.permute.xlu0 0
    %158 = vperm.xlu0 %157, %v140
    %v159 = vpop.permute.xlu0 %158
    %v165 = vunpack.c.l.b16 %v131
    %v166 = vunpack.c.l.b16 %v132
    %v167 = vunpack.c.l.b16 %v133
    %v168 = vunpack.c.l.b16 %v134
    %v169 = vpack.c.b16 %v166, %v165
    %v170 = vpack.c.b16 %v168, %v167
    %vm171 = vcmask 261120
    %v173 = vsel %vm171, %v169, 0
    %v176 = vsel %vm171, %v170, 0
    %178 = vmatprep.subr.bf16.mxu0 0
    %179 = vmatpush1.bf16.msra.mxu0 %v135
    %180 = vmatprep.subr.bf16.mxu0 0
    %181 = vmatpush1.bf16.msra.mxu0 %v136
    %182 = vmatprep.subr.bf16.mxu0 0
    %183 = vmatpush1.bf16.msra.mxu0 0
    %184 = vmatprep.subr.bf16.mxu0 0
    %185 = vmatpush1.bf16.msra.mxu0 0
    %186 = vmatprep.subr.bf16.mxu0 0
    %187 = vmatpush1.bf16.msra.mxu0 0
    %188 = vmatprep.subr.bf16.mxu0 0
    %189 = vmatpush1.bf16.msra.mxu0 0
    %190 = vmatprep.subr.bf16.mxu0 0
    %191 = vmatpush1.bf16.msra.mxu0 0
    %192 = vmatprep.subr.bf16.mxu0 0
    %193 = vmatpush1.bf16.msra.mxu0 0
    %194 = vmatprep.subr.bf16.mxu0 0
    %195 = vmatpush1.bf16.msra.mxu0 0
    %196 = vmatprep.subr.bf16.mxu0 0
    %197 = vmatpush1.bf16.msra.mxu0 0
    %198 = vmatprep.subr.bf16.mxu0 0
    %199 = vmatpush1.bf16.msra.mxu0 0
    %200 = vmatprep.subr.bf16.mxu0 0
    %201 = vmatpush1.bf16.msra.mxu0 0
    %202 = vmatprep.subr.bf16.mxu0 0
    %203 = vmatpush1.bf16.msra.mxu0 0
    %204 = vmatprep.subr.bf16.mxu0 0
    %205 = vmatpush1.bf16.msra.mxu0 0
    %206 = vmatprep.subr.bf16.mxu0 0
    %207 = vmatpush1.bf16.msra.mxu0 0
    %208 = vmatprep.subr.bf16.mxu0 0
    %209 = vmatpush1.bf16.msra.mxu0 0
    %210 = vmatprep.mubr.bf16.mxu0 0
    %211 = vmatmul.mubr.bf16.gmra.mrb[0].mxu0 %v173
    %v212 = vpop.f32.mrb[0].mxu0
    %v213 = vadd.f32 %v144, %v212
    %v214 = vpop.f32.mrb[0].mxu0
    %v215 = vpop.f32.mrb[0].mxu0
    %v216 = vadd.f32 %v149, %v215
    %v217 = vpop.f32.mrb[0].mxu0
    %218 = vmatprep.mubr.bf16.mxu0 0
    %219 = vmatmul.mubr.bf16.gmra.mrb[0].mxu0 %v176
    %v220 = vpop.f32.mrb[0].mxu0
    %v221 = vadd.f32 %v154, %v220
    %v222 = vpop.f32.mrb[0].mxu0
    %v223 = vpop.f32.mrb[0].mxu0
    %v224 = vadd.f32 %v159, %v223
    %v225 = vpop.f32.mrb[0].mxu0
    %226 = vdwg.mxu0
    %v227 = vmax.f32 %v213, 0.0
    %v228 = vmax.f32 %v216, 0.0
    %v229 = vmax.f32 %v221, 0.0
    %v230 = vmax.f32 %v224, 0.0
    %v231 = vld [vmem:[%s5] sm:$0xf]
    %v232 = vld [vmem:[%s5 + $0x4] sm:$0x1]
    %v233 = vpack.c.bf16 %v228, %v227
    %v234 = vpack.c.bf16 %v230, %v229
    %v235 = vld [vmem:[%s6] sm:$0xff]
    %v236 = vld [vmem:[%s6 + $0x8] sm:$0x3]
    %238 = vset.pattern.permute.xlu0 0
    %239 = vperm.xlu0 %238, %v235
    %v240 = vpop.permute.xlu0 %239
    %243 = vset.pattern.permute.xlu0 0
    %244 = vperm.xlu0 %243, %v236
    %v245 = vpop.permute.xlu0 %244
    %v249 = vunpack.c.l.b16 %v231
    %v250 = vunpack.c.l.b16 %v232
    %v251 = vpack.c.b16 %v250, %v249
    %v253 = vsel %vm171, %v251, 0
    %255 = vmatprep.subr.bf16.mxu0 0
    %256 = vmatpush1.bf16.msra.mxu0 %v233
    %257 = vmatprep.subr.bf16.mxu0 0
    %258 = vmatpush1.bf16.msra.mxu0 %v234
    %259 = vmatprep.subr.bf16.mxu0 0
    %260 = vmatpush1.bf16.msra.mxu0 0
    %261 = vmatprep.subr.bf16.mxu0 0
    %262 = vmatpush1.bf16.msra.mxu0 0
    %263 = vmatprep.subr.bf16.mxu0 0
    %264 = vmatpush1.bf16.msra.mxu0 0
    %265 = vmatprep.subr.bf16.mxu0 0
    %266 = vmatpush1.bf16.msra.mxu0 0
    %267 = vmatprep.subr.bf16.mxu0 0
    %268 = vmatpush1.bf16.msra.mxu0 0
    %269 = vmatprep.subr.bf16.mxu0 0
    %270 = vmatpush1.bf16.msra.mxu0 0
    %271 = vmatprep.subr.bf16.mxu0 0
    %272 = vmatpush1.bf16.msra.mxu0 0
    %273 = vmatprep.subr.bf16.mxu0 0
    %274 = vmatpush1.bf16.msra.mxu0 0
    %275 = vmatprep.subr.bf16.mxu0 0
    %276 = vmatpush1.bf16.msra.mxu0 0
    %277 = vmatprep.subr.bf16.mxu0 0
    %278 = vmatpush1.bf16.msra.mxu0 0
    %279 = vmatprep.subr.bf16.mxu0 0
    %280 = vmatpush1.bf16.msra.mxu0 0
    %281 = vmatprep.subr.bf16.mxu0 0
    %282 = vmatpush1.bf16.msra.mxu0 0
    %283 = vmatprep.subr.bf16.mxu0 0
    %284 = vmatpush1.bf16.msra.mxu0 0
    %285 = vmatprep.subr.bf16.mxu0 0
    %286 = vmatpush1.bf16.msra.mxu0 0
    %287 = vmatprep.mubr.bf16.mxu0 0
    %288 = vmatmul.mubr.bf16.gmra.mrb[0].mxu0 %v253
    %v289 = vpop.f32.mrb[0].mxu0
    %v290 = vadd.f32 %v240, %v289
    %v291 = vpop.f32.mrb[0].mxu0
    %v292 = vpop.f32.mrb[0].mxu0
    %v293 = vadd.f32 %v245, %v292
    %v294 = vpop.f32.mrb[0].mxu0
    %295 = vdwg.mxu0
    %v296 = vsel %vm74, %v293, -inf
    %v297 = vmax.f32 %v290, %v296
    %v298 = vrot.slane %v297, 4
    %v299 = vmax.f32 %v297, %v298
    %v300 = vrot.slane %v299, 2
    %v301 = vmax.f32 %v299, %v300
    %v302 = vrot.slane %v301, 1
    %v303 = vmax.f32 %v301, %v302
    %v304 = vsub.f32 %v290, %v303
    %v305 = vsub.f32 %v293, %v303
    %v306 = vmul.f32 %v304, 1.442695
    %v307 = vpow.pop %v306
    %v308 = vmul.f32 %v305, 1.442695
    %v309 = vpow.pop %v308
    %v310 = vsel %vm74, %v309, 0.0
    %v311 = vadd.f32 %v307, %v310
    %v312 = vrot.slane %v311, 4
    %v313 = vadd.f32 %v311, %v312
    %v314 = vrot.slane %v313, 2
    %v315 = vadd.f32 %v313, %v314
    %v316 = vrot.slane %v315, 1
    %v317 = vadd.f32 %v315, %v316
    %v318 = vlog2.pop %v317
    %v319 = vmul.f32 %v318, 0.6931472
    %v320 = vadd.f32 %v303, %v319
    %v321 = vsub.f32 %v290, %v320
    %v322 = vsub.f32 %v293, %v320
    %323 = vst [vmem:[#allocation2] sm:$0xff] %v321
    %324 = vst [vmem:[#allocation2 + $0x8] sm:$0x3] %v322
    // Predicated region
    $region30: #{tpu_custom_call.1} parent=1 // pred_check
      _
    $region31: #{tpu_custom_call.1} parent=1 // pred_check_branch
      %326 = sbr.rel (0) target = $region33
    $region32: #{tpu_custom_call.1} parent=1 // pred_region
      %s328 = ssub.s32 256, 256
      %329 = vsyncadd [#allocation3], %s328
      %s330 = sshll.u32 [#allocation2], 4
      %s331 = int_to_ptr.vmem [resolvable:$true] %s330
      %336 = dma.vmem_to_hbm [thread:$0]  %s331, 256, %s7, [#allocation3], 128, 128, 8
    $region33: #{tpu_custom_call.1} parent=1 // pred_fallthru
      _
    // Predicated region
    $region34: #{tpu_custom_call.1} parent=1 // pred_check
      _
    $region35: #{tpu_custom_call.1} parent=1 // pred_check_branch
      %338 = sbr.rel (0) target = $region37
    $region36: #{tpu_custom_call.1} parent=1 // pred_region
      %339 = dma.done [#allocation3], 256
    $region37: #{tpu_custom_call.1} parent=1 // pred_fallthru
      _
    %340 = vsyncpa [#allocation3], 1

</llo_original>
